<compile_context>
chip_gen: v7x
topology: tpu7x:2x2x1
jax: 0.10.0
libtpu: 0.0.40
codegen_flags: <defaults>
</compile_context>

<pallas_src>
import math
from functools import partial
from typing import List, Tuple

import jax
import jax.numpy as jnp
from jax.experimental import pallas as pl
from jax.experimental.pallas import tpu as pltpu

_EPS = 1e-5          # Fp32GroupNorm / Fp32LayerNorm eps
_LANE = 128
_SUBLANE = 8
_GELU_C = 0.7978845608028654   # sqrt(2/pi)


def _round_up(x: int, m: int) -> int:
    return ((x + m - 1) // m) * m


def _cdiv(a: int, b: int) -> int:
    return -(-a // b)


def _lcm(a: int, b: int) -> int:
    return a * b // math.gcd(a, b)


def _vmem_capacity_bytes() -> int:
    try:
        info = pltpu.get_tpu_info()
        for name in ("vmem_capacity_bytes", "vmem_size_bytes", "vmem_bytes"):
            v = getattr(info, name, None)
            if v:
                return int(v)
    except Exception:
        pass
    return 64 * 1024 * 1024        # conservative: v7x per-TC VMEM


_VMEM_CAP = _vmem_capacity_bytes()
_VMEM_LIMIT = int(min(_VMEM_CAP * 3 // 4, 96 * 1024 * 1024))   # 96 MiB v5e/v6e, 48 MiB v7x
_T_TARGET = 2048 if _VMEM_CAP >= 100 * 1024 * 1024 else 1024
_TILE_BUDGET = max(_VMEM_LIMIT - 8 * 1024 * 1024, 8 * 1024 * 1024)


# ----------------------------------------------------------------------------
# Kernels
# ----------------------------------------------------------------------------
def _gelu(x):
    # tanh-form GELU: the tanh runs on the EUP slot, only a handful of VALU ops.
    return 0.5 * x * (1.0 + jnp.tanh(_GELU_C * (x + 0.044715 * (x * x * x))))


def _conv_accumulate(xm_ref, xh_ref, w_ref, taps, trim):
    """Fused im2col conv: sum_q X[q : q+t_tile] @ W_q, f32 accumulation.

    xm_ref : (t_tile, sC)  stride-grouped main rows of this tile
    xh_ref : (halo,  sC)   the first `halo` grouped rows of the next tile
    w_ref  : (taps, sC, C_pad)
    """
    xm = xm_ref[...]
    t_tile, s_c = xm.shape
    x_full = None
    if taps > 1:
        x_full = jnp.concatenate([xm, xh_ref[...]], axis=0)   # (t_tile + halo, sC)
    acc = None
    for q in range(taps):
        xq = xm if q == 0 else x_full[q:q + t_tile, :]
        wq = w_ref[q]
        if q == taps - 1 and trim < s_c:
            # last grouped tap has only `trim` real rows (lane/sublane aligned)
            xq = xq[:, :trim]
            wq = wq[:trim, :]
        d = jnp.dot(xq, wq, preferred_element_type=jnp.float32)
        acc = d if acc is None else acc + d
    return acc


def _gn_stats_kernel(xm_ref, xh_ref, w_ref, sc_ref, stats_ref,
                     *, taps, trim, t_out, t_tile):
    """GroupNorm pass A: conv + bias, accumulate masked per-channel sum/sumsq."""
    t = pl.program_id(1)

    @pl.when(t == 0)
    def _init():
        stats_ref[...] = jnp.zeros_like(stats_ref)

    acc = _conv_accumulate(xm_ref, xh_ref, w_ref, taps, trim) + sc_ref[0:1, :]
    row = t * t_tile + jax.lax.broadcasted_iota(jnp.int32, acc.shape, 0)
    acc = jnp.where(row < t_out, acc, 0.0)          # mask padded time rows
    stats_ref[0:1, :] = stats_ref[0:1, :] + jnp.sum(acc, axis=0, keepdims=True)
    stats_ref[1:2, :] = stats_ref[1:2, :] + jnp.sum(acc * acc, axis=0, keepdims=True)


def _conv_block_kernel(*refs, taps, trim, norm, c_real):
    """Fused conv -> bias -> [GroupNorm apply | LayerNorm | none] -> GELU."""
    if norm == "group":
        xm_ref, xh_ref, w_ref, sc_ref, mr_ref, o_ref = refs
    else:
        xm_ref, xh_ref, w_ref, sc_ref, o_ref = refs

    acc = _conv_accumulate(xm_ref, xh_ref, w_ref, taps, trim) + sc_ref[0:1, :]

    if norm == "group":
        # mean / rstd precomputed per (batch, channel) by pass A
        acc = (acc - mr_ref[0:1, :]) * mr_ref[1:2, :]
        acc = acc * sc_ref[1:2, :] + sc_ref[2:3, :]
    elif norm == "layer":
        c_pad = acc.shape[-1]
        inv_c = 1.0 / float(c_real)
        mean = jnp.sum(acc, axis=-1, keepdims=True) * inv_c
        centered = acc - mean
        if c_real != c_pad:
            lane = jax.lax.broadcasted_iota(jnp.int32, acc.shape, 1)
            centered = jnp.where(lane < c_real, centered, 0.0)
        var = jnp.sum(centered * centered, axis=-1, keepdims=True) * inv_c
        acc = centered * jax.lax.rsqrt(var + _EPS)
        acc = acc * sc_ref[1:2, :] + sc_ref[2:3, :]

    o_ref[...] = _gelu(acc).astype(o_ref.dtype)


# ----------------------------------------------------------------------------
# Per-layer wrapper
# ----------------------------------------------------------------------------
def _choose_t_tile(t_out, s_c, c_pad, taps, halo, act_bytes, align):
    def footprint(t):
        return (2 * t * s_c * act_bytes            # main input tile (double buffered)
                + 2 * halo * s_c * act_bytes       # halo tile
                + 2 * taps * s_c * c_pad * act_bytes   # weights
                + 6 * _SUBLANE * c_pad * 4         # scales + stats
                + 2 * t * c_pad * act_bytes        # output tile
                + t * c_pad * 4                    # f32 accumulator
                + 2 * t * s_c * act_bytes)         # shifted-tap temporaries
    t = min(_round_up(_T_TARGET, align), _round_up(max(t_out, 1), align))
    while t > align and footprint(t) > _TILE_BUDGET:
        t = _round_up(max(t // 2, align), align)
    return t


def _fit_rows(x, rows):
    cur = x.shape[1]
    if cur < rows:
        return jnp.pad(x, ((0, 0), (0, rows - cur), (0, 0)))
    if cur > rows:
        return x[:, :rows, :]
    return x


def _conv_layer(xg, p, t_tile, n_t, t_out, compute_dtype):
    """One conv->norm->GELU block on stride-grouped input xg (B, T_g, s*C_in)."""
    B, t_g, s_c = xg.shape
    taps, halo, c_pad = p["taps"], p["halo"], p["c_pad"]
    trim, norm = p["trim"], p["norm"]
    t_pad = n_t * t_tile

    in_specs = [
        pl.BlockSpec((None, t_tile, s_c), lambda b, t: (b, t, 0)),
        # halo: first `halo` grouped rows of the NEXT tile (same array, 2nd spec)
        pl.BlockSpec((None, halo, s_c),
                     lambda b, t, _m=t_tile // halo: (b, (t + 1) * _m, 0)),
        pl.BlockSpec((taps, s_c, c_pad), lambda b, t: (0, 0, 0)),
        pl.BlockSpec((_SUBLANE, c_pad), lambda b, t: (0, 0)),
    ]
    operands = [xg, xg, p["w_g"], p["scales"]]

    if norm == "group":
        # pass A: resident per-(batch, channel) sum / sumsq accumulator over T
        stats = pl.pallas_call(
            partial(_gn_stats_kernel, taps=taps, trim=trim,
                    t_out=t_out, t_tile=t_tile),
            out_shape=jax.ShapeDtypeStruct((B, _SUBLANE, c_pad), jnp.float32),
            grid=(B, n_t),
            in_specs=list(in_specs),
            out_specs=pl.BlockSpec((None, _SUBLANE, c_pad), lambda b, t: (b, 0, 0)),
            compiler_params=pltpu.CompilerParams(
                dimension_semantics=("parallel", "arbitrary"),
                vmem_limit_bytes=_VMEM_LIMIT),
        )(*operands)
        mean = stats[:, 0, :] / float(t_out)
        var = jnp.maximum(stats[:, 1, :] / float(t_out) - mean * mean, 0.0)
        rstd = jax.lax.rsqrt(var + _EPS)
        mr = jnp.zeros((B, _SUBLANE, c_pad), jnp.float32)
        mr = mr.at[:, 0, :].set(mean).at[:, 1, :].set(rstd)
        in_specs = in_specs + [pl.BlockSpec((None, _SUBLANE, c_pad),
                                            lambda b, t: (b, 0, 0))]
        operands = operands + [mr]

    itemsize = jnp.dtype(compute_dtype).itemsize
    cost = pl.CostEstimate(
        flops=int(2 * B * t_pad * taps * s_c * c_pad),
        transcendentals=int(B * t_pad * c_pad),
        bytes_accessed=int(B * t_pad * (s_c + c_pad) * itemsize
                           + taps * s_c * c_pad * itemsize))

    out = pl.pallas_call(
        partial(_conv_block_kernel, taps=taps, trim=trim, norm=norm,
                c_real=p["c_real"]),
        out_shape=jax.ShapeDtypeStruct((B, t_pad, c_pad), compute_dtype),
        grid=(B, n_t),
        in_specs=in_specs,
        out_specs=pl.BlockSpec((None, t_tile, c_pad), lambda b, t: (b, t, 0)),
        compiler_params=pltpu.CompilerParams(
            dimension_semantics=("parallel", "parallel"),
            vmem_limit_bytes=_VMEM_LIMIT),
        cost_estimate=cost,
    )(*operands)
    return out


# ----------------------------------------------------------------------------
# Model
# ----------------------------------------------------------------------------
class Conv1DFeatureExtractionModel:
    """JAX/Pallas port of fairseq Conv1DFeatureExtractionModel (inference)."""

    def __init__(self,
                 dim_input: int,
                 conv_layers: List[Tuple[int, int, int]],
                 key,
                 mode: str = "default",
                 conv_bias: bool = False,
                 output: str = "valid",
                 compute_dtype=jnp.bfloat16):
        assert mode in {"default", "layer_norm"}
        assert output in {"valid", "same"}
        self.output = output
        self.compute_dtype = compute_dtype
        self.out_dim = conv_layers[-1][0]
        self.layers = []

        in_real = dim_input
        in_pad = dim_input          # raw input channels stay unpadded
        for i, (dim, k, s) in enumerate(conv_layers):
            key, wkey, bkey = jax.random.split(key, 3)
            c_pad = _round_up(dim, _LANE)
            taps = _cdiv(k, s)                              # grouped taps
            halo = _round_up(max(taps - 1, 1), _SUBLANE)    # grouped halo rows
            s_c = s * in_pad
            # number of real rows in the last grouped tap; trim it only when the
            # slice stays lane/sublane aligned (in_pad multiple of 128)
            k_rows = (k - (taps - 1) * s) * in_pad
            trim = k_rows if (in_pad % _LANE == 0 and k_rows < s_c) else s_c

            # nn.init.kaiming_normal_ default (fan_in, a=0): std = sqrt(2/(C_in*k))
            std = math.sqrt(2.0 / (in_real * k))
            w = std * jax.random.normal(wkey, (k, in_real, dim), jnp.float32)
            # grouped / flattened weight: tap q, channel-block r <-> original tap q*s+r
            w_g = jnp.zeros((taps, s_c, c_pad), jnp.float32)
            for q in range(taps):
                for r in range(s):
                    j = q * s + r
                    if j < k:
                        w_g = w_g.at[q, r * in_pad:r * in_pad + in_real, :dim].set(w[j])
            w_g = w_g.astype(compute_dtype)                 # bf16 MXU fast path

            if conv_bias:
                bound = 1.0 / math.sqrt(in_real * k)        # PyTorch Conv1d bias init
                b = jax.random.uniform(bkey, (dim,), jnp.float32, -bound, bound)
            else:
                b = jnp.zeros((dim,), jnp.float32)
            scales = jnp.zeros((_SUBLANE, c_pad), jnp.float32)
            scales = scales.at[0, :dim].set(b)              # row 0: conv bias
            scales = scales.at[1, :dim].set(1.0)            # row 1: gamma
            # row 2: beta (zeros)

            if mode == "layer_norm":
                norm = "layer"
            elif mode == "default" and i == 0:
                norm = "group"
            else:
                norm = None

            self.layers.append(dict(w_g=w_g, scales=scales, k=k, s=s, taps=taps,
                                    halo=halo, trim=trim, norm=norm, c_real=dim,
                                    c_pad=c_pad, in_pad=in_pad, in_real=in_real))
            in_real, in_pad = dim, c_pad

    def __call__(self, x):
        # x: (B, T, C_in) — same layout as the PyTorch module's input.
        B = x.shape[0]
        if self.output == "same":
            length = x.shape[1]
            x = jnp.pad(x, ((0, 0), (0, 10), (0, 0)))   # F.pad(x, [0,0, 0,10, 0,0])
        x = x.astype(self.compute_dtype)
        # (PyTorch transposes to NCT here; the kernels consume channels-last.)

        # ---- static plan: true output lengths (forward) ----
        t_in = x.shape[1]
        t_outs = []
        for p in self.layers:
            t_out = (t_in - p["k"]) // p["s"] + 1
            if t_out <= 0:
                raise ValueError("input sequence too short for the conv stack")
            t_outs.append(t_out)
            t_in = t_out

        # ---- static plan: tiling + required padded lengths (backward) ----
        act_bytes = jnp.dtype(self.compute_dtype).itemsize
        plans = [None] * len(self.layers)
        s_next, need_next = 1, 0
        for i in range(len(self.layers) - 1, -1, -1):
            p = self.layers[i]
            s_c = p["s"] * p["in_pad"]
            align = _lcm(_lcm(_SUBLANE, s_next), p["halo"])
            t_tile = _choose_t_tile(t_outs[i], s_c, p["c_pad"], p["taps"],
                                    p["halo"], act_bytes, align)
            n_t = max(_cdiv(t_outs[i], t_tile), _cdiv(need_next, t_tile), 1)
            plans[i] = (t_tile, n_t)
            # rows the previous layer (or the raw input) must provide
            need_next = p["s"] * (n_t * t_tile + p["halo"])
            s_next = p["s"]

        # pad the raw input once (zeros) to the planned length; every later
        # inter-layer pad is absorbed into the previous kernel's output grid.
        p0 = self.layers[0]
        min_rows = (t_outs[0] - 1) * p0["s"] + p0["k"]
        x = _fit_rows(x, max(need_next, _round_up(min_rows, p0["s"])))

        for i, p in enumerate(self.layers):
            t_tile, n_t = plans[i]
            rows = x.shape[1]                       # divisible by p["s"] by plan
            xg = x.reshape(B, rows // p["s"], p["s"] * p["in_pad"])
            x = _conv_layer(xg, p, t_tile, n_t, t_outs[i], self.compute_dtype)

        out = x[:, :t_outs[-1], :self.out_dim].astype(jnp.float32)
        if self.output == "same":
            out = out[:, :length, :]
        return out


if __name__ == "__main__":
    key = jax.random.PRNGKey(0)
    k_in, k_model = jax.random.split(key)

    B, T, C_in = 2, 32, 8
    conv_layers = [(32, 3, 2), (32, 3, 2), (32, 2, 1)]   # (dim, kernel, stride)
    x = jax.random.normal(k_in, (B, T, C_in), dtype=jnp.float32)

    # default mode (GroupNorm on layer 0), 'valid' output
    model = Conv1DFeatureExtractionModel(C_in, conv_layers, k_model,
                                         mode="default", conv_bias=False,
                                         output="valid")
    y = model(x)                          # expected shape: (2, 6, 32)
    jax.block_until_ready(y)
    assert y.shape == (B, 6, conv_layers[-1][0]), y.shape
    assert bool(jnp.all(jnp.isfinite(y)))

    # layer_norm mode, 'same' output — exercises the masked-LayerNorm path.
    model_ln = Conv1DFeatureExtractionModel(C_in, conv_layers, k_model,
                                            mode="layer_norm", conv_bias=False,
                                            output="same")
    y_ln = model_ln(x)
    jax.block_until_ready(y_ln)
    assert y_ln.shape[0] == B and y_ln.shape[2] == conv_layers[-1][0], y_ln.shape
    assert bool(jnp.all(jnp.isfinite(y_ln)))

    print("KERNEL_OK")
</pallas_src>

<mosaic_0001>
module attributes {stable_mosaic.version = 11 : i64} {
  func.func @_gn_stats_kernel(%arg0: i32, %arg1: i32, %arg2: memref<1x16x16xbf16, #tpu.memory_space<vmem>>, %arg3: memref<1x8x16xbf16, #tpu.memory_space<vmem>>, %arg4: memref<2x16x128xbf16, #tpu.memory_space<vmem>>, %arg5: memref<8x128xf32, #tpu.memory_space<vmem>>, %arg6: memref<1x8x128xf32, #tpu.memory_space<vmem>>) attributes {dimension_semantics = [#tpu.dimension_semantics<parallel>, #tpu.dimension_semantics<arbitrary>], iteration_bounds = array<i64: 2, 3>, scalar_prefetch = 0 : i64, scratch_operands = 0 : i64, tpu.core_type = #tpu.core_type<tc>, window_params = [{transform_indices = @transform_0, window_bounds = array<i64: 1, 16, 16>}, {transform_indices = @transform_1, window_bounds = array<i64: 1, 8, 16>}, {pipeline_mode = #tpu.pipeline_mode<synchronous>, transform_indices = @transform_2, window_bounds = array<i64: 2, 16, 128>}, {pipeline_mode = #tpu.pipeline_mode<synchronous>, transform_indices = @transform_3, window_bounds = array<i64: 8, 128>}, {transform_indices = @transform_4, window_bounds = array<i64: 1, 8, 128>}]} {
    %c0_i32 = arith.constant 0 : i32
    %0 = arith.cmpi eq, %arg1, %c0_i32 : i32
    %1 = arith.extui %0 : i1 to i32
    %c0_i32_0 = arith.constant 0 : i32
    %2 = arith.cmpi ne, %1, %c0_i32_0 : i32
    scf.if %2 {
      %cst_29 = arith.constant 0.000000e+00 : f32
      %44 = vector.broadcast %cst_29 : f32 to vector<8x128xf32>
      %c0_30 = arith.constant 0 : index
      %c0_31 = arith.constant 0 : index
      %c0_32 = arith.constant 0 : index
      %45 = vector.load %arg6[%c0_30, %c0_31, %c0_32] : memref<1x8x128xf32, #tpu.memory_space<vmem>>, vector<1x8x128xf32>
      %46 = vector.shape_cast %45 : vector<1x8x128xf32> to vector<8x128xf32>
      %47 = vector.shape_cast %44 : vector<8x128xf32> to vector<1x8x128xf32>
      tpu.vector_store %arg6[%c0_30, %c0_31, %c0_32], %47 {strides = array<i32>} : memref<1x8x128xf32, #tpu.memory_space<vmem>>, vector<1x8x128xf32>,
    } else {
    }
    %c0 = arith.constant 0 : index
    %c0_1 = arith.constant 0 : index
    %c0_2 = arith.constant 0 : index
    %3 = vector.load %arg2[%c0, %c0_1, %c0_2] : memref<1x16x16xbf16, #tpu.memory_space<vmem>>, vector<1x16x16xbf16>
    %4 = vector.shape_cast %3 : vector<1x16x16xbf16> to vector<16x16xbf16>
    %c0_3 = arith.constant 0 : index
    %c0_4 = arith.constant 0 : index
    %c0_5 = arith.constant 0 : index
    %5 = vector.load %arg3[%c0_3, %c0_4, %c0_5] : memref<1x8x16xbf16, #tpu.memory_space<vmem>>, vector<1x8x16xbf16>
    %6 = vector.shape_cast %5 : vector<1x8x16xbf16> to vector<8x16xbf16>
    %7 = tpu.concatenate %4, %6 in 0 : vector<16x16xbf16>, vector<8x16xbf16> -> vector<24x16xbf16>
    %c0_6 = arith.constant 0 : index
    %c0_7 = arith.constant 0 : index
    %c0_8 = arith.constant 0 : index
    %8 = vector.load %arg4[%c0_6, %c0_7, %c0_8] : memref<2x16x128xbf16, #tpu.memory_space<vmem>>, vector<1x16x128xbf16>
    %9 = vector.shape_cast %8 : vector<1x16x128xbf16> to vector<16x128xbf16>
    %cst = arith.constant dense<0.000000e+00> : vector<16x128xf32>
    %10 = tpu.matmul %4, %9, %cst {dimension_numbers = #tpu.dot_dimension_numbers<[1], [0], [0], [1], [0, 0, 1, 1], [], []>} : vector<16x16xbf16>, vector<16x128xbf16>, vector<16x128xf32> -> vector<16x128xf32>
    %11 = vector.extract_strided_slice %7 {offsets = [1, 0], sizes = [16, 16], strides = [1, 1]} : vector<24x16xbf16> to vector<16x16xbf16>
    %c1 = arith.constant 1 : index
    %c0_9 = arith.constant 0 : index
    %c0_10 = arith.constant 0 : index
    %12 = vector.load %arg4[%c1, %c0_9, %c0_10] : memref<2x16x128xbf16, #tpu.memory_space<vmem>>, vector<1x16x128xbf16>
    %13 = vector.shape_cast %12 : vector<1x16x128xbf16> to vector<16x128xbf16>
    %cst_11 = arith.constant dense<0.000000e+00> : vector<16x128xf32>
    %14 = tpu.matmul %11, %13, %cst_11 {dimension_numbers = #tpu.dot_dimension_numbers<[1], [0], [0], [1], [0, 0, 1, 1], [], []>} : vector<16x16xbf16>, vector<16x128xbf16>, vector<16x128xf32> -> vector<16x128xf32>
    %15 = arith.addf %10, %14 : vector<16x128xf32>
    %c0_12 = arith.constant 0 : index
    %c0_13 = arith.constant 0 : index
    %16 = vector.load %arg5[%c0_12, %c0_13] : memref<8x128xf32, #tpu.memory_space<vmem>>, vector<1x128xf32>
    %17 = vector.broadcast %16 : vector<1x128xf32> to vector<16x128xf32>
    %18 = arith.addf %15, %17 : vector<16x128xf32>
    %c16_i32 = arith.constant 16 : i32
    %19 = arith.muli %arg1, %c16_i32 : i32
    %20 = tpu.iota {dimensions = array<i32: 0>} : vector<16x128xi32>
    %21 = vector.broadcast %19 : i32 to vector<16x128xi32>
    %22 = arith.addi %21, %20 : vector<16x128xi32>
    %c15_i32 = arith.constant 15 : i32
    %23 = vector.broadcast %c15_i32 : i32 to vector<16x128xi32>
    %24 = arith.cmpi slt, %22, %23 : vector<16x128xi32>
    %cst_14 = arith.constant 0.000000e+00 : f32
    %25 = vector.broadcast %cst_14 : f32 to vector<16x128xf32>
    %26 = arith.select %24, %18, %25 : vector<16x128xi1>, vector<16x128xf32>
    %c0_15 = arith.constant 0 : index
    %c0_16 = arith.constant 0 : index
    %c0_17 = arith.constant 0 : index
    %27 = vector.load %arg6[%c0_15, %c0_16, %c0_17] : memref<1x8x128xf32, #tpu.memory_space<vmem>>, vector<1x1x128xf32>
    %28 = vector.shape_cast %27 : vector<1x1x128xf32> to vector<1x128xf32>
    %cst_18 = arith.constant dense<0.000000e+00> : vector<128xf32>
    %29 = vector.multi_reduction <add>, %26, %cst_18 [0] : vector<16x128xf32> to vector<128xf32>
    %30 = vector.shape_cast %29 : vector<128xf32> to vector<1x128xf32>
    %31 = arith.addf %28, %30 : vector<1x128xf32>
    %c0_19 = arith.constant 0 : index
    %c0_20 = arith.constant 0 : index
    %c0_21 = arith.constant 0 : index
    %32 = vector.load %arg6[%c0_19, %c0_20, %c0_21] : memref<1x8x128xf32, #tpu.memory_space<vmem>>, vector<1x1x128xf32>
    %33 = vector.shape_cast %32 : vector<1x1x128xf32> to vector<1x128xf32>
    %34 = vector.shape_cast %31 : vector<1x128xf32> to vector<1x1x128xf32>
    tpu.vector_store %arg6[%c0_19, %c0_20, %c0_21], %34 {strides = array<i32>} : memref<1x8x128xf32, #tpu.memory_space<vmem>>, vector<1x1x128xf32>,
    %c0_22 = arith.constant 0 : index
    %c1_23 = arith.constant 1 : index
    %c0_24 = arith.constant 0 : index
    %35 = vector.load %arg6[%c0_22, %c1_23, %c0_24] : memref<1x8x128xf32, #tpu.memory_space<vmem>>, vector<1x1x128xf32>
    %36 = vector.shape_cast %35 : vector<1x1x128xf32> to vector<1x128xf32>
    %37 = arith.mulf %26, %26 : vector<16x128xf32>
    %cst_25 = arith.constant dense<0.000000e+00> : vector<128xf32>
    %38 = vector.multi_reduction <add>, %37, %cst_25 [0] : vector<16x128xf32> to vector<128xf32>
    %39 = vector.shape_cast %38 : vector<128xf32> to vector<1x128xf32>
    %40 = arith.addf %36, %39 : vector<1x128xf32>
    %c0_26 = arith.constant 0 : index
    %c1_27 = arith.constant 1 : index
    %c0_28 = arith.constant 0 : index
    %41 = vector.load %arg6[%c0_26, %c1_27, %c0_28] : memref<1x8x128xf32, #tpu.memory_space<vmem>>, vector<1x1x128xf32>
    %42 = vector.shape_cast %41 : vector<1x1x128xf32> to vector<1x128xf32>
    %43 = vector.shape_cast %40 : vector<1x128xf32> to vector<1x1x128xf32>
    tpu.vector_store %arg6[%c0_26, %c1_27, %c0_28], %43 {strides = array<i32>} : memref<1x8x128xf32, #tpu.memory_space<vmem>>, vector<1x1x128xf32>,
    return
  }
  func.func @transform_0(%arg0: i32, %arg1: i32) -> (i32, i32, i32) {
    %c0_i32 = arith.constant 0 : i32
    %c0_i32_0 = arith.constant 0 : i32
    return %arg0, %arg1, %c0_i32 : i32, i32, i32
  }
  func.func @transform_1(%arg0: i32, %arg1: i32) -> (i32, i32, i32) {
    %c1_i32 = arith.constant 1 : i32
    %0 = arith.addi %arg1, %c1_i32 : i32
    %c2_i32 = arith.constant 2 : i32
    %1 = arith.muli %0, %c2_i32 : i32
    %c0_i32 = arith.constant 0 : i32
    %c0_i32_0 = arith.constant 0 : i32
    return %arg0, %1, %c0_i32 : i32, i32, i32
  }
  func.func @transform_2(%arg0: i32, %arg1: i32) -> (i32, i32, i32) {
    %c0_i32 = arith.constant 0 : i32
    %c0_i32_0 = arith.constant 0 : i32
    %c0_i32_1 = arith.constant 0 : i32
    %c0_i32_2 = arith.constant 0 : i32
    return %c0_i32, %c0_i32_0, %c0_i32_1 : i32, i32, i32
  }
  func.func @transform_3(%arg0: i32, %arg1: i32) -> (i32, i32) {
    %c0_i32 = arith.constant 0 : i32
    %c0_i32_0 = arith.constant 0 : i32
    %c0_i32_1 = arith.constant 0 : i32
    return %c0_i32, %c0_i32_0 : i32, i32
  }
  func.func @transform_4(%arg0: i32, %arg1: i32) -> (i32, i32, i32) {
    %c0_i32 = arith.constant 0 : i32
    %c0_i32_0 = arith.constant 0 : i32
    %c0_i32_1 = arith.constant 0 : i32
    return %arg0, %c0_i32, %c0_i32_0 : i32, i32, i32
  }
}

</mosaic_0001>

<llo_original>
// kernel: tpu_custom_call.1
$region0: #{tpu_custom_call.1}
  #allocation0 [shape = 'u32[]', space=smem, size = 0x4, offset = 0x4, fixed_abs, tag = 'smem constant byte address 0x4 - core index']
  #allocation1 [shape = 'u32[144,128]{1,0:T(1,128)}', space=vmem, size = 0x12000, scoped, tag = 'internal scratch']
  %s0 = inlined_call_operand.vmem [shape: bf16[2,56,16], index: 0, kind: input, shape index: {}]
  %s1 = inlined_call_operand.vmem [shape: bf16[2,56,16], index: 1, kind: input, shape index: {}]
  %s2 = inlined_call_operand.vmem [shape: bf16[2,16,128], index: 2, kind: input, shape index: {}]
  %s3 = inlined_call_operand.vmem [shape: f32[8,128], index: 3, kind: input, shape index: {}]
  %s4 = inlined_call_operand.hbm [shape: f32[2,8,128], index: 4, kind: output, shape index: {}]
  %s5 = sld [smem:[#allocation0]]
  $region53: #{tpu_custom_call.1} parent=0
    _
  %s7 = ssub.s32 1, %s5
  %s8 = scalar_select 0, %s7, %s5
  $region1: #{tpu_custom_call.1} parent=0
    #allocation2 [shape = 'u8[8192]{0}', space=vmem, size = 0x2000, scoped, tag = 'output window, operand 0']
    #allocation3 [shape = 's32[2]{0}', space=sflag, size = 0x8, scoped, tag = 'scoped memory for tpu_custom_call.1']
    %9 = vsyncpa [#allocation3], 0
    %s10 = scalar_lea.sflag [#allocation3], 1
    %11 = vsyncpa %s10, 0
    loop: start=0, step=1, limit=8
    $region2: #{tpu_custom_call.1} parent=1 // loop_pre_header
      _
    $region3: #{tpu_custom_call.1} parent=1 // loop_header
      %s13 = sphi 0, %s17
      %p14 = scmp.ge.s32.totalorder %s13, 8
      %s20 = sphi 0, %s32
      %s21 = sphi 0, %s28
      %s22 = sphi 0, %s20
      %s23 = sphi 0, %s21
      %s24 = sphi 0, %s22
      %s25 = sphi 0, %s23
      %s37 = sphi 0, %s39
      %s40 = sphi 0, %s37
      %s41 = sphi 0, %s40
      %s57 = sphi 0, %s41
      %s69 = sphi 0, %s71
      %s72 = sphi 0, %s69
      %s73 = sphi 0, %s72
      %s89 = sphi 0, %s73
      %s93 = sphi 0, %s93
      %s95 = sphi 0, %s93
      %s96 = sphi 0, %s95
      %s110 = sphi 0, %s96
      %s114 = sphi 0, %s114
      %s116 = sphi 0, %s114
      %s117 = sphi 0, %s116
      %s131 = sphi 0, %s117
      %s137 = sphi 0, %s139
      %s140 = sphi 0, %s137
      %s141 = sphi 0, %s140
      %s157 = sphi 0, %s141
    $region4: #{tpu_custom_call.1} parent=1 // loop_header_branch
      %16 = sbr.rel (%p14) target = $region8
    $region5: #{tpu_custom_call.1} parent=1 // loop_body
      %s18 = ssub.s32 %s13, 1
      %s19 = ssub.s32 %s13, 2
      %s26 = sadd.s32 1, %s21
      %p27 = scmp.ge.s32.totalorder %s26, 3
      %s28 = scalar_select %p27, 0, %s26
      %s29 = sadd.s32 1, %s20
      %s30 = scalar_select %p27, %s29, %s20
      %p31 = scmp.ge.s32.totalorder %s30, 2
      %s32 = scalar_select %p31, 0, %s30
      %s33 = ssub.s32 %s20, %s32
      %s34 = ssub.s32 %s21, %s28
      %s35 = sor.u32 %s33, %s34
      %p36 = scmp.eq.s32.totalorder %s35, 0
      %s38 = sadd.s32 %s37, 1
      %s39 = scalar_select %p36, %s37, %s38
      %p42 = pneg %p36
      %p43 = scmp.eq.s32.totalorder %s13, 5
      %p44 = por %p42, %p43
      %p45 = scmp.ne.s32.totalorder %s37, %s40
      %p46 = scmp.eq.s32.totalorder %s13, 0
      %p47 = por %p45, %p46
      %p48 = scmp.ne.s32.totalorder %s37, %s40
      %p49 = scmp.eq.s32.totalorder %s18, 5
      %p50 = por %p48, %p49
      %p51 = scmp.ne.s32.totalorder %s40, %s41
      %p52 = scmp.eq.s32.totalorder %s18, 0
      %p53 = por %p51, %p52
      %p54 = scmp.ne.s32.totalorder %s40, %s41
      %p55 = scmp.eq.s32.totalorder %s19, 5
      %p56 = por %p54, %p55
      %p58 = scmp.ne.s32.totalorder %s41, %s57
      %p59 = scmp.eq.s32.totalorder %s19, 0
      %p60 = por %p58, %p59
      %s61 = sadd.s32 %s21, 1
      %s62 = smul.u32 %s61, 2
      %s63 = sadd.s32 %s28, 1
      %s64 = smul.u32 %s63, 2
      %s65 = ssub.s32 %s20, %s32
      %s66 = ssub.s32 %s62, %s64
      %s67 = sor.u32 %s65, %s66
      %p68 = scmp.eq.s32.totalorder %s67, 0
      %s70 = sadd.s32 %s69, 1
      %s71 = scalar_select %p68, %s69, %s70
      %p74 = pneg %p68
      %p75 = scmp.eq.s32.totalorder %s13, 5
      %p76 = por %p74, %p75
      %p77 = scmp.ne.s32.totalorder %s69, %s72
      %p78 = scmp.eq.s32.totalorder %s13, 0
      %p79 = por %p77, %p78
      %p80 = scmp.ne.s32.totalorder %s69, %s72
      %p81 = scmp.eq.s32.totalorder %s18, 5
      %p82 = por %p80, %p81
      %p83 = scmp.ne.s32.totalorder %s72, %s73
      %p84 = scmp.eq.s32.totalorder %s18, 0
      %p85 = por %p83, %p84
      %p86 = scmp.ne.s32.totalorder %s72, %s73
      %p87 = scmp.eq.s32.totalorder %s19, 5
      %p88 = por %p86, %p87
      %p90 = scmp.ne.s32.totalorder %s73, %s89
      %p91 = scmp.eq.s32.totalorder %s19, 0
      %p92 = por %p90, %p91
      %s94 = sadd.s32 %s93, 1
      %p97 = scmp.eq.s32.totalorder %s13, 5
      %p98 = scmp.ne.s32.totalorder %s93, %s95
      %p99 = scmp.eq.s32.totalorder %s13, 0
      %p100 = por %p98, %p99
      %p101 = scmp.ne.s32.totalorder %s93, %s95
      %p102 = scmp.eq.s32.totalorder %s18, 5
      %p103 = por %p101, %p102
      %p104 = scmp.ne.s32.totalorder %s95, %s96
      %p105 = scmp.eq.s32.totalorder %s18, 0
      %p106 = por %p104, %p105
      %p107 = scmp.ne.s32.totalorder %s95, %s96
      %p108 = scmp.eq.s32.totalorder %s19, 5
      %p109 = por %p107, %p108
      %p111 = scmp.ne.s32.totalorder %s96, %s110
      %p112 = scmp.eq.s32.totalorder %s19, 0
      %p113 = por %p111, %p112
      %s115 = sadd.s32 %s114, 1
      %p118 = scmp.eq.s32.totalorder %s13, 5
      %p119 = scmp.ne.s32.totalorder %s114, %s116
      %p120 = scmp.eq.s32.totalorder %s13, 0
      %p121 = por %p119, %p120
      %p122 = scmp.ne.s32.totalorder %s114, %s116
      %p123 = scmp.eq.s32.totalorder %s18, 5
      %p124 = por %p122, %p123
      %p125 = scmp.ne.s32.totalorder %s116, %s117
      %p126 = scmp.eq.s32.totalorder %s18, 0
      %p127 = por %p125, %p126
      %p128 = scmp.ne.s32.totalorder %s116, %s117
      %p129 = scmp.eq.s32.totalorder %s19, 5
      %p130 = por %p128, %p129
      %p132 = scmp.ne.s32.totalorder %s117, %s131
      %p133 = scmp.eq.s32.totalorder %s19, 0
      %p134 = por %p132, %p133
      %s135 = ssub.s32 %s20, %s32
      %p136 = scmp.eq.s32.totalorder %s135, 0
      %s138 = sadd.s32 %s137, 1
      %s139 = scalar_select %p136, %s137, %s138
      %p142 = pneg %p136
      %p143 = scmp.eq.s32.totalorder %s13, 5
      %p144 = por %p142, %p143
      %p145 = scmp.ne.s32.totalorder %s137, %s140
      %p146 = scmp.eq.s32.totalorder %s13, 0
      %p147 = por %p145, %p146
      %p148 = scmp.ne.s32.totalorder %s137, %s140
      %p149 = scmp.eq.s32.totalorder %s18, 5
      %p150 = por %p148, %p149
      %p151 = scmp.ne.s32.totalorder %s140, %s141
      %p152 = scmp.eq.s32.totalorder %s18, 0
      %p153 = por %p151, %p152
      %p154 = scmp.ne.s32.totalorder %s140, %s141
      %p155 = scmp.eq.s32.totalorder %s19, 5
      %p156 = por %p154, %p155
      %p158 = scmp.ne.s32.totalorder %s141, %s157
      %p159 = scmp.eq.s32.totalorder %s19, 0
      %p160 = por %p158, %p159
      %p161 = scmp.le.s32.totalorder 1, %s13
      %p162 = scmp.lt.s32.totalorder %s13, 7
      %p163 = pnand %p161, %p162
      %p164 = pneg %p163
      // Predicated region
      $region9: #{tpu_custom_call.1} parent=5 // pred_check
        _
      $region10: #{tpu_custom_call.1} parent=5 // pred_check_branch
        %166 = sbr.rel (%p163) target = $region12
      $region11: #{tpu_custom_call.1} parent=5 // pred_region
        %s167 = ssub.s32 %s13, 1
        // Predicated region
        $region13: #{tpu_custom_call.1} parent=11 // pred_check
          %p168 = pneg %p106
        $region14: #{tpu_custom_call.1} parent=11 // pred_check_branch
          %170 = sbr.rel (%p168) target = $region16
        $region15: #{tpu_custom_call.1} parent=11 // pred_region
          _
        $region16: #{tpu_custom_call.1} parent=11 // pred_fallthru
          _
        // Predicated region
        $region17: #{tpu_custom_call.1} parent=11 // pred_check
          %p171 = pneg %p127
        $region18: #{tpu_custom_call.1} parent=11 // pred_check_branch
          %173 = sbr.rel (%p171) target = $region20
        $region19: #{tpu_custom_call.1} parent=11 // pred_region
          _
        $region20: #{tpu_custom_call.1} parent=11 // pred_fallthru
          _
      $region12: #{tpu_custom_call.1} parent=5 // pred_fallthru
        _
      %p174 = scmp.lt.s32.totalorder %s13, 6
      // Predicated region
      $region21: #{tpu_custom_call.1} parent=5 // pred_check
        %p175 = pneg %p174
      $region22: #{tpu_custom_call.1} parent=5 // pred_check_branch
        %177 = sbr.rel (%p175) target = $region24
      $region23: #{tpu_custom_call.1} parent=5 // pred_region
        // Predicated region
        $region25: #{tpu_custom_call.1} parent=23 // pred_check
          %p178 = pneg %p47
        $region26: #{tpu_custom_call.1} parent=23 // pred_check_branch
          %180 = sbr.rel (%p178) target = $region28
        $region27: #{tpu_custom_call.1} parent=23 // pred_region
          %s181 = smul.u32 2, %s21
          %s182 = ssub.s32 7, %s181
          %p183 = scmp.lt.s32.totalorder %s182, 2
          %s184 = scalar_select %p183, %s182, 2
          %s185 = smul.u32 64, %s184
          %p186 = scmp.lt.s32.totalorder %s20, 1
          %s187 = scalar_select %p186, %s20, 1
          %p188 = scmp.lt.s32.totalorder %s181, 6
          %s189 = scalar_select %p188, %s181, 6
          %s190 = smul.addr %s187, 7
          %s191 = sadd.s32 %s189, %s190
          %s192 = smul.addr %s191, 4
          %s193 = scalar_lea.vmem %s0, %s192
          %s194 = smul.u32 2, %s21
          %s195 = ssub.s32 7, %s194
          %p196 = scmp.lt.s32.totalorder %s195, 2
          %s197 = scalar_select %p196, %s195, 2
          %s198 = smul.u32 64, %s197
        $region28: #{tpu_custom_call.1} parent=23 // pred_fallthru
          _
        // Predicated region
        $region29: #{tpu_custom_call.1} parent=23 // pred_check
          %p199 = pneg %p79
        $region30: #{tpu_custom_call.1} parent=23 // pred_check_branch
          %201 = sbr.rel (%p199) target = $region32
        $region31: #{tpu_custom_call.1} parent=23 // pred_region
          %s202 = sadd.s32 %s21, 1
          %s203 = smul.u32 %s202, 2
          %p204 = scmp.lt.s32.totalorder %s20, 1
          %s205 = scalar_select %p204, %s20, 1
          %p206 = scmp.lt.s32.totalorder %s203, 6
          %s207 = scalar_select %p206, %s203, 6
          %s208 = smul.addr %s205, 7
          %s209 = sadd.s32 %s207, %s208
          %s210 = smul.addr %s209, 4
          %s211 = scalar_lea.vmem %s1, %s210
          %s212 = sadd.s32 %s21, 1
          %s213 = smul.u32 %s212, 2
        $region32: #{tpu_custom_call.1} parent=23 // pred_fallthru
          _
      $region24: #{tpu_custom_call.1} parent=5 // pred_fallthru
        _
      %p214 = scmp.le.s32.totalorder 1, %s13
      %p215 = scmp.lt.s32.totalorder %s13, 7
      %p216 = pnand %p214, %p215
      %p217 = pneg %p216
      // Predicated region
      $region33: #{tpu_custom_call.1} parent=5 // pred_check
        _
      $region34: #{tpu_custom_call.1} parent=5 // pred_check_branch
        %219 = sbr.rel (%p216) target = $region36
      $region35: #{tpu_custom_call.1} parent=5 // pred_region
        %s220 = ssub.s32 %s13, 1
        %s221 = smul.u32 2, %s23
        %s222 = ssub.s32 7, %s221
        %p223 = scmp.lt.s32.totalorder %s222, 2
        %s224 = scalar_select %p223, %s222, 2
        %s225 = smul.u32 64, %s224
        %p226 = scmp.lt.s32.totalorder %s22, 1
        %s227 = scalar_select %p226, %s22, 1
        %p228 = scmp.lt.s32.totalorder %s221, 6
        %s229 = scalar_select %p228, %s221, 6
        %s230 = smul.addr %s227, 7
        %s231 = sadd.s32 %s229, %s230
        %s232 = smul.addr %s231, 4
        %s233 = scalar_lea.vmem %s0, %s232
        %p234 = pneg %p53
        %p235 = pneg %p50
        %s236 = sadd.s32 %s23, 1
        %s237 = smul.u32 %s236, 2
        %p238 = scmp.lt.s32.totalorder %s22, 1
        %s239 = scalar_select %p238, %s22, 1
        %p240 = scmp.lt.s32.totalorder %s237, 6
        %s241 = scalar_select %p240, %s237, 6
        %s242 = smul.addr %s239, 7
        %s243 = sadd.s32 %s241, %s242
        %s244 = smul.addr %s243, 4
        %s245 = scalar_lea.vmem %s1, %s244
        %p246 = pneg %p85
        %p247 = pneg %p82
        %p248 = pneg %p106
        %p249 = pneg %p103
        %p250 = pneg %p127
        %p251 = pneg %p124
        %p252 = pneg %p153
        %p253 = pneg %p150
        %s254 = sand.u32 %s140, 1
        %s255 = scalar_lea.sflag [#allocation3], %s254
        %s256 = sand.u32 %s140, 1
        %s257 = smul.addr %s256, 8
        %s258 = scalar_lea.vmem [#allocation2], %s257
        %s259 = smul.u32 2, %s23
        %s260 = ssub.s32 7, %s259
        %p261 = scmp.lt.s32.totalorder %s260, 2
        %s262 = scalar_select %p261, %s260, 2
        %s263 = smul.u32 64, %s262
        %p264 = scmp.lt.s32.totalorder %s22, 1
        %s265 = scalar_select %p264, %s22, 1
        %p266 = scmp.lt.s32.totalorder %s259, 6
        %s267 = scalar_select %p266, %s259, 6
        %s268 = smul.addr %s265, 7
        %s269 = sadd.s32 %s267, %s268
        %s270 = smul.addr %s269, 4
        %s271 = scalar_lea.vmem %s0, %s270
        %s272 = smul.u32 2, %s23
        %s273 = ssub.s32 7, %s272
        %p274 = scmp.lt.s32.totalorder %s273, 2
        %s275 = scalar_select %p274, %s273, 2
        %s276 = smul.u32 64, %s275
        %s277 = sadd.s32 %s23, 1
        %s278 = smul.u32 %s277, 2
        %p279 = scmp.lt.s32.totalorder %s22, 1
        %s280 = scalar_select %p279, %s22, 1
        %p281 = scmp.lt.s32.totalorder %s278, 6
        %s282 = scalar_select %p281, %s278, 6
        %s283 = smul.addr %s280, 7
        %s284 = sadd.s32 %s282, %s283
        %s285 = smul.addr %s284, 4
        %s286 = scalar_lea.vmem %s1, %s285
        %s287 = sadd.s32 %s23, 1
        %s288 = smul.u32 %s287, 2
        %p290 = scmp.eq.s32.totalorder %s23, 0
        // Predicated region
        $region37: #{tpu_custom_call.1} parent=35 // pred_check
          %p291 = pneg %p290
        $region38: #{tpu_custom_call.1} parent=35 // pred_check_branch
          %293 = sbr.rel (%p291) target = $region40
        $region39: #{tpu_custom_call.1} parent=35 // pred_region
          %294 = vst [vmem:[%s258] sm:$0xff] 0.0
        $region40: #{tpu_custom_call.1} parent=35 // pred_fallthru
          _
        %v295 = vld [vmem:[%s271] sm:$0xf]
        %v296 = vld [vmem:[%s271 + $0x4] sm:$0xf]
        %v297 = vld [vmem:[%s286] sm:$0xf]
        %v300 = vunpack.c.l.b16 %v295
        %v301 = vunpack.c.l.b16 %v296
        %v302 = vpack.c.b16 %v301, %v300
        %v303 = vld [vmem:[%s2] sm:$0xf]
        %v304 = vld [vmem:[%s2 + $0x4] sm:$0xf]
        %s305 = scalar_lea.vmem %s2, 8
        %v306 = vld [vmem:[%s305] sm:$0xf]
        %v307 = vld [vmem:[%s305 + $0x4] sm:$0xf]
        %vm308 = vsmask.f32 7424
        %v310 = vshrl.u32 %v302, 16
        %v312 = vshll.u32 %v302, 16
        %v314 = vrot.slane %v312, 1
        %v315 = vor.u32 %v310, %v314
        %v317 = vshll.u32 %v297, 16
        %v319 = vrot.slane %v317, 1
        %v320 = vsel %vm308, %v315, %v319
        %v323 = vunpack.c.l.b16 %v306
        %v324 = vunpack.c.l.b16 %v307
        %v325 = vpack.c.b16 %v324, %v323
        %vm327 = vcmask 130048
        %v329 = vsel %vm327, %v320, 0
        %331 = vmatprep.subr.bf16.mxu0 0
        %332 = vmatpush1.bf16.msra.mxu0 %v325
        %333 = vmatprep.subr.bf16.mxu0 0
        %334 = vmatpush1.bf16.msra.mxu0 0
        %335 = vmatprep.subr.bf16.mxu0 0
        %336 = vmatpush1.bf16.msra.mxu0 0
        %337 = vmatprep.subr.bf16.mxu0 0
        %338 = vmatpush1.bf16.msra.mxu0 0
        %339 = vmatprep.subr.bf16.mxu0 0
        %340 = vmatpush1.bf16.msra.mxu0 0
        %341 = vmatprep.subr.bf16.mxu0 0
        %342 = vmatpush1.bf16.msra.mxu0 0
        %343 = vmatprep.subr.bf16.mxu0 0
        %344 = vmatpush1.bf16.msra.mxu0 0
        %345 = vmatprep.subr.bf16.mxu0 0
        %346 = vmatpush1.bf16.msra.mxu0 0
        %347 = vmatprep.subr.bf16.mxu0 0
        %348 = vmatpush1.bf16.msra.mxu0 0
        %349 = vmatprep.subr.bf16.mxu0 0
        %350 = vmatpush1.bf16.msra.mxu0 0
        %351 = vmatprep.subr.bf16.mxu0 0
        %352 = vmatpush1.bf16.msra.mxu0 0
        %353 = vmatprep.subr.bf16.mxu0 0
        %354 = vmatpush1.bf16.msra.mxu0 0
        %355 = vmatprep.subr.bf16.mxu0 0
        %356 = vmatpush1.bf16.msra.mxu0 0
        %357 = vmatprep.subr.bf16.mxu0 0
        %358 = vmatpush1.bf16.msra.mxu0 0
        %359 = vmatprep.subr.bf16.mxu0 0
        %360 = vmatpush1.bf16.msra.mxu0 0
        %361 = vmatprep.subr.bf16.mxu0 0
        %362 = vmatpush1.bf16.msra.mxu0 0
        %363 = vmatprep.mubr.bf16.mxu0 0
        %364 = vmatmul.mubr.bf16.gmra.mrb[0].mxu0 %v329
        %v365 = vpop.f32.mrb[0].mxu0
        %v366 = vadd.f32 0.0, %v365
        %v367 = vpop.f32.mrb[0].mxu0
        %v368 = vpop.f32.mrb[0].mxu0
        %v369 = vadd.f32 0.0, %v368
        %v370 = vpop.f32.mrb[0].mxu0
        %371 = vdwg.mxu0
        %v374 = vunpack.c.l.b16 %v303
        %v375 = vunpack.c.l.b16 %v304
        %v376 = vpack.c.b16 %v375, %v374
        %v378 = vsel %vm327, %v302, 0
        %380 = vmatprep.subr.bf16.mxu0 0
        %381 = vmatpush1.bf16.msra.mxu0 %v376
        %382 = vmatprep.subr.bf16.mxu0 0
        %383 = vmatpush1.bf16.msra.mxu0 0
        %384 = vmatprep.subr.bf16.mxu0 0
        %385 = vmatpush1.bf16.msra.mxu0 0
        %386 = vmatprep.subr.bf16.mxu0 0
        %387 = vmatpush1.bf16.msra.mxu0 0
        %388 = vmatprep.subr.bf16.mxu0 0
        %389 = vmatpush1.bf16.msra.mxu0 0
        %390 = vmatprep.subr.bf16.mxu0 0
        %391 = vmatpush1.bf16.msra.mxu0 0
        %392 = vmatprep.subr.bf16.mxu0 0
        %393 = vmatpush1.bf16.msra.mxu0 0
        %394 = vmatprep.subr.bf16.mxu0 0
        %395 = vmatpush1.bf16.msra.mxu0 0
        %396 = vmatprep.subr.bf16.mxu0 0
        %397 = vmatpush1.bf16.msra.mxu0 0
        %398 = vmatprep.subr.bf16.mxu0 0
        %399 = vmatpush1.bf16.msra.mxu0 0
        %400 = vmatprep.subr.bf16.mxu0 0
        %401 = vmatpush1.bf16.msra.mxu0 0
        %402 = vmatprep.subr.bf16.mxu0 0
        %403 = vmatpush1.bf16.msra.mxu0 0
        %404 = vmatprep.subr.bf16.mxu0 0
        %405 = vmatpush1.bf16.msra.mxu0 0
        %406 = vmatprep.subr.bf16.mxu0 0
        %407 = vmatpush1.bf16.msra.mxu0 0
        %408 = vmatprep.subr.bf16.mxu0 0
        %409 = vmatpush1.bf16.msra.mxu0 0
        %410 = vmatprep.subr.bf16.mxu0 0
        %411 = vmatpush1.bf16.msra.mxu0 0
        %412 = vmatprep.mubr.bf16.mxu0 0
        %413 = vmatmul.mubr.bf16.gmra.mrb[0].mxu0 %v378
        %v414 = vpop.f32.mrb[0].mxu0
        %v415 = vadd.f32 %v366, %v414
        %v416 = vpop.f32.mrb[0].mxu0
        %v417 = vpop.f32.mrb[0].mxu0
        %v418 = vadd.f32 %v369, %v417
        %v419 = vpop.f32.mrb[0].mxu0
        %420 = vdwg.mxu0
        %v421 = vld [vmem:[%s3] sm:$0x1]
        %v422 = vlaneseq
        %v423 = vshrl.u32 %v422, 7
        %v424 = vsub.s32 0, %v423
        %v425 = vrot.slane %v421, %v424
        %v426 = vadd.f32 %v415, %v425
        %v427 = vadd.f32 %v418, %v425
        %s428 = smul.u32 %s23, 16
        %v429 = vlaneseq
        %v430 = vshrl.u32 %v429, 7
        %v431 = vadd.s32 %v430, 8
        %v432 = vstv %s428
        %v433 = vadd.s32 %v432, %v430
        %v434 = vadd.s32 %v432, %v431
        %vm435 = vcmp.lt.s32.totalorder %v433, 15
        %vm436 = vcmp.lt.s32.totalorder %v434, 15
        %v437 = vsel %vm435, %v426, 0.0
        %v438 = vsel %vm436, %v427, 0.0
        %v439 = vld [vmem:[%s258] sm:$0x1]
        %v440 = vadd.f32 %v437, %v438
        %v441 = vrot.slane %v440, 4
        %v442 = vadd.f32 %v440, %v441
        %v443 = vrot.slane %v442, 2
        %v444 = vadd.f32 %v442, %v443
        %v445 = vrot.slane %v444, 1
        %v446 = vadd.f32 %v444, %v445
        %v447 = vadd.f32 %v439, %v446
        %448 = vst [vmem:[%s258] sm:$0x1] %v447
        %v449 = vld [vmem:[%s258 + $0x1] sm:$0x1]
        %v450 = vmul.f32 %v437, %v437
        %v451 = vmul.f32 %v438, %v438
        %v452 = vadd.f32 %v450, %v451
        %v453 = vrot.slane %v452, 4
        %v454 = vadd.f32 %v452, %v453
        %v455 = vrot.slane %v454, 2
        %v456 = vadd.f32 %v454, %v455
        %v457 = vrot.slane %v456, 1
        %v458 = vadd.f32 %v456, %v457
        %v459 = vadd.f32 %v449, %v458
        %460 = vst [vmem:[%s258 + $0x1] sm:$0x1] %v459
        %s461 = sand.u32 %s140, 1
        %s462 = scalar_lea.sflag [#allocation3], %s461
        %s463 = sand.u32 %s140, 1
        %s464 = smul.addr %s463, 8
        %s465 = scalar_lea.vmem [#allocation2], %s464
        // Predicated region
        $region41: #{tpu_custom_call.1} parent=35 // pred_check
          %p466 = pneg %p150
        $region42: #{tpu_custom_call.1} parent=35 // pred_check_branch
          %468 = sbr.rel (%p466) target = $region44
        $region43: #{tpu_custom_call.1} parent=35 // pred_region
          %s470 = ssub.s32 128, 128
          %471 = vsyncadd %s462, %s470
          %s472 = smul.addr %s22, 128
          %s473 = scalar_lea.hbm %s4, %s472
          %s475 = sshll.u32 %s465, 4
          %s476 = int_to_ptr.vmem [resolvable:$true] %s475
          %478 = dma.vmem_to_hbm [thread:$0]  %s476, 128, %s473, %s462
        $region44: #{tpu_custom_call.1} parent=35 // pred_fallthru
          _
      $region36: #{tpu_custom_call.1} parent=5 // pred_fallthru
        _
      %p479 = scmp.le.s32.totalorder 2, %s13
      // Predicated region
      $region45: #{tpu_custom_call.1} parent=5 // pred_check
        %p480 = pneg %p479
      $region46: #{tpu_custom_call.1} parent=5 // pred_check_branch
        %482 = sbr.rel (%p480) target = $region48
      $region47: #{tpu_custom_call.1} parent=5 // pred_region
        %s483 = ssub.s32 %s13, 2
        // Predicated region
        $region49: #{tpu_custom_call.1} parent=47 // pred_check
          %p484 = pneg %p156
        $region50: #{tpu_custom_call.1} parent=47 // pred_check_branch
          %486 = sbr.rel (%p484) target = $region52
        $region51: #{tpu_custom_call.1} parent=47 // pred_region
          %s487 = sand.u32 %s141, 1
          %s488 = scalar_lea.sflag [#allocation3], %s487
          %s489 = sand.u32 %s141, 1
          %s490 = smul.addr %s489, 8
          %s491 = scalar_lea.vmem [#allocation2], %s490
          %492 = dma.done %s488, 128
        $region52: #{tpu_custom_call.1} parent=47 // pred_fallthru
          _
      $region48: #{tpu_custom_call.1} parent=5 // pred_fallthru
        _
    $region6: #{tpu_custom_call.1} parent=1 // loop_footer
      %s17 = sadd.s32 1, %s13
    $region7: #{tpu_custom_call.1} parent=1 // loop_footer_branch
      %12 = sbr.rel target = $region3
    $region8: #{tpu_custom_call.1} parent=1 // loop_exit
      _
    %493 = vsyncpa [#allocation3], 1
    %s494 = scalar_lea.sflag [#allocation3], 1
    %495 = vsyncpa %s494, 1

</llo_original>
